<compile_context>
chip_gen: v7x
topology: tpu7x:2x2x1
jax: 0.10.0
libtpu: 0.0.40
codegen_flags: <defaults>
</compile_context>

<pallas_src>
import functools
import math

import jax
import jax.numpy as jnp
from jax import lax
from jax.experimental import pallas as pl
from jax.experimental.pallas import tpu as pltpu


_NEG_LARGE = -1e30  # finite "minus infinity": avoids inf arithmetic / NaN corner cases


def _flash_attn_kernel(q_ref, k_ref, v_ref, o_ref,
                       qs_scr, m_scr, l_scr, acc_scr,
                       *, scale, block_kv, kv_valid, exp_dtype):
    kv_idx = pl.program_id(3)

    @pl.when(kv_idx == 0)
    def _init():
        # Hoisted: scale + bf16-cast Q once per query tile (reused for every KV step).
        qs_scr[...] = (q_ref[...] * scale).astype(jnp.bfloat16)
        m_scr[...] = jnp.full_like(m_scr, _NEG_LARGE)
        l_scr[...] = jnp.zeros_like(l_scr)
        acc_scr[...] = jnp.zeros_like(acc_scr)

    q = qs_scr[...]                               # (tq, D)  bf16, pre-scaled
    k = k_ref[...].astype(jnp.bfloat16)           # (tk, D)  bf16 for the MXU
    v = v_ref[...].astype(jnp.bfloat16)           # (tk, Dv) bf16 for the MXU

    # scores = Q @ K^T, contracting over D directly (no XLU transpose of K).
    s = lax.dot_general(
        q, k,
        dimension_numbers=(((1,), (1,)), ((), ())),
        preferred_element_type=jnp.float32,
    )                                             # (tq, tk) f32 accumulation

    if kv_valid is not None:
        # Mask zero-padded key positions (wrapper padded Sk up to a tile multiple).
        pos = kv_idx * block_kv + lax.broadcasted_iota(jnp.int32, s.shape, 1)
        s = jnp.where(pos < kv_valid, s, _NEG_LARGE)

    # Online (streaming) softmax update; m/l are (tq, 128) lane-replicated.
    m_prev = m_scr[...]
    m_new = jnp.maximum(m_prev, jnp.max(s, axis=-1, keepdims=True))
    alpha = jnp.exp(m_prev - m_new)                                  # (tq, 128) f32
    p = jnp.exp((s - m_new[:, 0:1]).astype(exp_dtype))               # (tq, tk)

    l_scr[...] = alpha * l_scr[...] + jnp.sum(
        p.astype(jnp.float32), axis=-1, keepdims=True)
    pv = lax.dot_general(
        p.astype(jnp.bfloat16), v,
        dimension_numbers=(((1,), (0,)), ((), ())),
        preferred_element_type=jnp.float32,
    )                                                                # (tq, Dv) f32
    acc_scr[...] = acc_scr[...] * alpha[:, 0:1] + pv
    m_scr[...] = m_new

    @pl.when(kv_idx == pl.num_programs(3) - 1)
    def _finalize():
        inv_l = pl.reciprocal(l_scr[...], approx=True)   # EUP; VALU stays free
        o_ref[...] = (acc_scr[...] * inv_l[:, 0:1]).astype(o_ref.dtype)


def _round_up(x, m):
    return ((x + m - 1) // m) * m


def _choose_tile(dim, target, mult):
    """Tile size <= ~target, multiple of `mult`, minimizing the padded extent."""
    target = max(_round_up(target, mult), mult)
    if dim <= target:
        return _round_up(dim, mult)
    n_blocks = -(-dim // target)
    return _round_up(-(-dim // n_blocks), mult)


def calculate_attention(Q, K, V, *, q_tile=512, kv_tile=512,
                        exp_dtype=jnp.bfloat16):
    """Pallas equivalent of CalculateAttention.forward(Q, K, V)."""
    B, H, Sq, D = Q.shape
    assert K.shape[0] == B and K.shape[1] == H and K.shape[3] == D
    Sk = K.shape[2]
    assert V.shape[:3] == (B, H, Sk)
    Dv = V.shape[3]

    scale = 1.0 / math.sqrt(D)

    # Query tiles: multiples of 16 (bf16 sublane packing). KV tiles: multiples of 128
    # so the (tq, tk) score/p temporaries are lane-dense.
    tq = _choose_tile(Sq, q_tile, 16)
    tk = _choose_tile(Sk, kv_tile, 128)
    sq_pad = _round_up(Sq, tq)
    sk_pad = _round_up(Sk, tk)

    if sq_pad != Sq:
        Q = jnp.pad(Q, ((0, 0), (0, 0), (0, sq_pad - Sq), (0, 0)))
    if sk_pad != Sk:
        K = jnp.pad(K, ((0, 0), (0, 0), (0, sk_pad - Sk), (0, 0)))
        V = jnp.pad(V, ((0, 0), (0, 0), (0, sk_pad - Sk), (0, 0)))
    kv_valid = Sk if sk_pad != Sk else None

    n_q_blocks = sq_pad // tq
    grid = (B, H, n_q_blocks, sk_pad // tk)

    kernel = functools.partial(
        _flash_attn_kernel, scale=scale, block_kv=tk,
        kv_valid=kv_valid, exp_dtype=exp_dtype)

    itemsize = Q.dtype.itemsize
    cost = pl.CostEstimate(
        flops=2 * B * H * sq_pad * sk_pad * (D + Dv),
        transcendentals=B * H * sq_pad * sk_pad,
        bytes_accessed=(B * H * sq_pad * D * itemsize
                        + n_q_blocks * B * H * sk_pad * (D + Dv) * K.dtype.itemsize
                        + B * H * sq_pad * Dv * itemsize),
    )

    out = pl.pallas_call(
        kernel,
        out_shape=jax.ShapeDtypeStruct((B, H, sq_pad, Dv), Q.dtype),
        grid_spec=pltpu.PrefetchScalarGridSpec(
            num_scalar_prefetch=0,
            grid=grid,
            in_specs=[
                pl.BlockSpec((None, None, tq, D),
                             lambda b, h, qi, ki: (b, h, qi, 0)),
                pl.BlockSpec((None, None, tk, D),
                             lambda b, h, qi, ki: (b, h, ki, 0)),
                pl.BlockSpec((None, None, tk, Dv),
                             lambda b, h, qi, ki: (b, h, ki, 0)),
            ],
            # Same output block across the KV axis -> VMEM-resident accumulator.
            out_specs=pl.BlockSpec((None, None, tq, Dv),
                                   lambda b, h, qi, ki: (b, h, qi, 0)),
            scratch_shapes=[
                pltpu.VMEM((tq, D), jnp.bfloat16),    # pre-scaled bf16 Q tile
                pltpu.VMEM((tq, 128), jnp.float32),   # running max m (lane-replicated)
                pltpu.VMEM((tq, 128), jnp.float32),   # running sum l (lane-replicated)
                pltpu.VMEM((tq, Dv), jnp.float32),    # output accumulator
            ],
        ),
        compiler_params=pltpu.CompilerParams(
            # KV reduction axis last and "arbitrary"; B/H/q-tiles "parallel"
            # (megacore-shardable: B*H*Sq/tq >= 2 keeps both v7x TensorCores busy).
            dimension_semantics=("parallel", "parallel", "parallel", "arbitrary"),
            # Headroom over the default scoped limit for the larger query tiles,
            # while staying comfortably under v7x's 64 MiB physical VMEM.
            vmem_limit_bytes=48 * 1024 * 1024,
        ),
        cost_estimate=cost,
    )(Q, K, V)

    if sq_pad != Sq:
        out = out[:, :, :Sq, :]
    return out


def _reference(Q, K, V):
    d = Q.shape[-1]
    scores = jnp.matmul(Q, jnp.swapaxes(K, -1, -2)) / math.sqrt(d)
    attn = jax.nn.softmax(scores, axis=-1)
    return jnp.matmul(attn, V)


if __name__ == "__main__":
    # Test 1: small shape consistent with the module (also exercises pad + KV mask).
    kq, kk, kv = jax.random.split(jax.random.PRNGKey(0), 3)
    B, H, S, D = 2, 2, 8, 32
    Q = jax.random.normal(kq, (B, H, S, D), dtype=jnp.float32)
    K = jax.random.normal(kk, (B, H, S, D), dtype=jnp.float32)
    V = jax.random.normal(kv, (B, H, S, D), dtype=jnp.float32)

    out = jax.block_until_ready(calculate_attention(Q, K, V))
    ref = _reference(Q, K, V)
    assert out.shape == ref.shape
    err = float(jnp.max(jnp.abs(out - ref)))
    assert err < 5e-2, err

    # Test 2: multiple query tiles and multiple KV reduction steps (no padding).
    kq2, kk2, kv2 = jax.random.split(jax.random.PRNGKey(1), 3)
    B2, H2, S2, D2 = 1, 2, 256, 64
    Q2 = jax.random.normal(kq2, (B2, H2, S2, D2), dtype=jnp.float32)
    K2 = jax.random.normal(kk2, (B2, H2, S2, D2), dtype=jnp.float32)
    V2 = jax.random.normal(kv2, (B2, H2, S2, D2), dtype=jnp.float32)
    out2 = jax.block_until_ready(
        calculate_attention(Q2, K2, V2, q_tile=128, kv_tile=128))
    ref2 = _reference(Q2, K2, V2)
    err2 = float(jnp.max(jnp.abs(out2 - ref2)))
    assert err2 < 5e-2, err2

    # Test 3: awkward (non-power-of-two) sequence lengths -> padded + masked path.
    kq3, kk3, kv3 = jax.random.split(jax.random.PRNGKey(2), 3)
    Q3 = jax.random.normal(kq3, (1, 1, 72, 64), dtype=jnp.float32)
    K3 = jax.random.normal(kk3, (1, 1, 200, 64), dtype=jnp.float32)
    V3 = jax.random.normal(kv3, (1, 1, 200, 64), dtype=jnp.float32)
    out3 = jax.block_until_ready(calculate_attention(Q3, K3, V3))
    ref3 = _reference(Q3, K3, V3)
    err3 = float(jnp.max(jnp.abs(out3 - ref3)))
    assert err3 < 5e-2, err3

    print("KERNEL_OK")
</pallas_src>

<mosaic_0001>
module attributes {stable_mosaic.version = 11 : i64} {
  func.func @_flash_attn_kernel(%arg0: i32, %arg1: i32, %arg2: i32, %arg3: i32, %arg4: memref<1x1x16x32xf32, #tpu.memory_space<vmem>>, %arg5: memref<1x1x128x32xf32, #tpu.memory_space<vmem>>, %arg6: memref<1x1x128x32xf32, #tpu.memory_space<vmem>>, %arg7: memref<1x1x16x32xf32, #tpu.memory_space<vmem>>, %arg8: memref<16x32xbf16, #tpu.memory_space<vmem>>, %arg9: memref<16x128xf32, #tpu.memory_space<vmem>>, %arg10: memref<16x128xf32, #tpu.memory_space<vmem>>, %arg11: memref<16x32xf32, #tpu.memory_space<vmem>>) attributes {dimension_semantics = [#tpu.dimension_semantics<parallel>, #tpu.dimension_semantics<parallel>, #tpu.dimension_semantics<parallel>, #tpu.dimension_semantics<arbitrary>], iteration_bounds = array<i64: 2, 2, 1, 1>, scalar_prefetch = 0 : i64, scratch_operands = 4 : i64, tpu.core_type = #tpu.core_type<tc>, window_params = [{transform_indices = @transform_0, window_bounds = array<i64: 1, 1, 16, 32>}, {transform_indices = @transform_1, window_bounds = array<i64: 1, 1, 128, 32>}, {transform_indices = @transform_2, window_bounds = array<i64: 1, 1, 128, 32>}, {transform_indices = @transform_3, window_bounds = array<i64: 1, 1, 16, 32>}]} {
    %c0_i32 = arith.constant 0 : i32
    %0 = arith.cmpi eq, %arg3, %c0_i32 : i32
    %1 = arith.extui %0 : i1 to i32
    %c0_i32_0 = arith.constant 0 : i32
    %2 = arith.cmpi ne, %1, %c0_i32_0 : i32
    scf.if %2 {
      %c0_28 = arith.constant 0 : index
      %c0_29 = arith.constant 0 : index
      %c0_30 = arith.constant 0 : index
      %c0_31 = arith.constant 0 : index
      %50 = vector.load %arg4[%c0_28, %c0_29, %c0_30, %c0_31] : memref<1x1x16x32xf32, #tpu.memory_space<vmem>>, vector<1x1x16x32xf32>
      %51 = vector.shape_cast %50 : vector<1x1x16x32xf32> to vector<16x32xf32>
      %cst_32 = arith.constant 0.176776692 : f32
      %52 = vector.broadcast %cst_32 : f32 to vector<16x32xf32>
      %53 = arith.mulf %51, %52 : vector<16x32xf32>
      %54 = arith.truncf %53 : vector<16x32xf32> to vector<16x32xbf16>
      %c0_33 = arith.constant 0 : index
      %c0_34 = arith.constant 0 : index
      %55 = vector.load %arg8[%c0_33, %c0_34] : memref<16x32xbf16, #tpu.memory_space<vmem>>, vector<16x32xbf16>
      tpu.vector_store %arg8[%c0_33, %c0_34], %54 {strides = array<i32>} : memref<16x32xbf16, #tpu.memory_space<vmem>>, vector<16x32xbf16>,
      %cst_35 = arith.constant -1.000000e+30 : f32
      %56 = vector.broadcast %cst_35 : f32 to vector<16x128xf32>
      %c0_36 = arith.constant 0 : index
      %c0_37 = arith.constant 0 : index
      %57 = vector.load %arg9[%c0_36, %c0_37] : memref<16x128xf32, #tpu.memory_space<vmem>>, vector<16x128xf32>
      tpu.vector_store %arg9[%c0_36, %c0_37], %56 {strides = array<i32>} : memref<16x128xf32, #tpu.memory_space<vmem>>, vector<16x128xf32>,
      %cst_38 = arith.constant 0.000000e+00 : f32
      %58 = vector.broadcast %cst_38 : f32 to vector<16x128xf32>
      %c0_39 = arith.constant 0 : index
      %c0_40 = arith.constant 0 : index
      %59 = vector.load %arg10[%c0_39, %c0_40] : memref<16x128xf32, #tpu.memory_space<vmem>>, vector<16x128xf32>
      tpu.vector_store %arg10[%c0_39, %c0_40], %58 {strides = array<i32>} : memref<16x128xf32, #tpu.memory_space<vmem>>, vector<16x128xf32>,
      %cst_41 = arith.constant 0.000000e+00 : f32
      %60 = vector.broadcast %cst_41 : f32 to vector<16x32xf32>
      %c0_42 = arith.constant 0 : index
      %c0_43 = arith.constant 0 : index
      %61 = vector.load %arg11[%c0_42, %c0_43] : memref<16x32xf32, #tpu.memory_space<vmem>>, vector<16x32xf32>
      tpu.vector_store %arg11[%c0_42, %c0_43], %60 {strides = array<i32>} : memref<16x32xf32, #tpu.memory_space<vmem>>, vector<16x32xf32>,
    } else {
    }
    %c0 = arith.constant 0 : index
    %c0_1 = arith.constant 0 : index
    %3 = vector.load %arg8[%c0, %c0_1] : memref<16x32xbf16, #tpu.memory_space<vmem>>, vector<16x32xbf16>
    %c0_2 = arith.constant 0 : index
    %c0_3 = arith.constant 0 : index
    %c0_4 = arith.constant 0 : index
    %c0_5 = arith.constant 0 : index
    %4 = vector.load %arg5[%c0_2, %c0_3, %c0_4, %c0_5] : memref<1x1x128x32xf32, #tpu.memory_space<vmem>>, vector<1x1x128x32xf32>
    %5 = vector.shape_cast %4 : vector<1x1x128x32xf32> to vector<128x32xf32>
    %6 = arith.truncf %5 : vector<128x32xf32> to vector<128x32xbf16>
    %c0_6 = arith.constant 0 : index
    %c0_7 = arith.constant 0 : index
    %c0_8 = arith.constant 0 : index
    %c0_9 = arith.constant 0 : index
    %7 = vector.load %arg6[%c0_6, %c0_7, %c0_8, %c0_9] : memref<1x1x128x32xf32, #tpu.memory_space<vmem>>, vector<1x1x128x32xf32>
    %8 = vector.shape_cast %7 : vector<1x1x128x32xf32> to vector<128x32xf32>
    %9 = arith.truncf %8 : vector<128x32xf32> to vector<128x32xbf16>
    %cst = arith.constant dense<0.000000e+00> : vector<16x128xf32>
    %10 = tpu.matmul %3, %6, %cst {dimension_numbers = #tpu.dot_dimension_numbers<[1], [1], [0], [0], [0, 0, 1, 0], [], []>} : vector<16x32xbf16>, vector<128x32xbf16>, vector<16x128xf32> -> vector<16x128xf32>
    %c128_i32 = arith.constant 128 : i32
    %11 = arith.muli %arg3, %c128_i32 : i32
    %12 = tpu.iota {dimensions = array<i32: 1>} : vector<16x128xi32>
    %13 = vector.broadcast %11 : i32 to vector<16x128xi32>
    %14 = arith.addi %13, %12 : vector<16x128xi32>
    %c8_i32 = arith.constant 8 : i32
    %15 = vector.broadcast %c8_i32 : i32 to vector<16x128xi32>
    %16 = arith.cmpi slt, %14, %15 : vector<16x128xi32>
    %cst_10 = arith.constant -1.000000e+30 : f32
    %17 = vector.broadcast %cst_10 : f32 to vector<16x128xf32>
    %18 = arith.select %16, %10, %17 : vector<16x128xi1>, vector<16x128xf32>
    %c0_11 = arith.constant 0 : index
    %c0_12 = arith.constant 0 : index
    %19 = vector.load %arg9[%c0_11, %c0_12] : memref<16x128xf32, #tpu.memory_space<vmem>>, vector<16x128xf32>
    %cst_13 = arith.constant dense<0xFF800000> : vector<16xf32>
    %20 = vector.multi_reduction <maximumf>, %18, %cst_13 [1] : vector<16x128xf32> to vector<16xf32>
    %21 = vector.shape_cast %20 : vector<16xf32> to vector<16x1xf32>
    %22 = vector.broadcast %21 : vector<16x1xf32> to vector<16x128xf32>
    %23 = arith.maximumf %19, %22 : vector<16x128xf32>
    %24 = arith.subf %19, %23 : vector<16x128xf32>
    %25 = math.exp %24 : vector<16x128xf32>
    %26 = vector.extract_strided_slice %23 {offsets = [0, 0], sizes = [16, 1], strides = [1, 1]} : vector<16x128xf32> to vector<16x1xf32>
    %27 = vector.broadcast %26 : vector<16x1xf32> to vector<16x128xf32>
    %28 = arith.subf %18, %27 : vector<16x128xf32>
    %29 = arith.truncf %28 : vector<16x128xf32> to vector<16x128xbf16>
    %30 = math.exp %29 : vector<16x128xbf16>
    %c0_14 = arith.constant 0 : index
    %c0_15 = arith.constant 0 : index
    %31 = vector.load %arg10[%c0_14, %c0_15] : memref<16x128xf32, #tpu.memory_space<vmem>>, vector<16x128xf32>
    %32 = arith.mulf %25, %31 : vector<16x128xf32>
    %33 = arith.extf %30 : vector<16x128xbf16> to vector<16x128xf32>
    %cst_16 = arith.constant dense<0.000000e+00> : vector<16xf32>
    %34 = vector.multi_reduction <add>, %33, %cst_16 [1] : vector<16x128xf32> to vector<16xf32>
    %35 = vector.shape_cast %34 : vector<16xf32> to vector<16x1xf32>
    %36 = vector.broadcast %35 : vector<16x1xf32> to vector<16x128xf32>
    %37 = arith.addf %32, %36 : vector<16x128xf32>
    %c0_17 = arith.constant 0 : index
    %c0_18 = arith.constant 0 : index
    %38 = vector.load %arg10[%c0_17, %c0_18] : memref<16x128xf32, #tpu.memory_space<vmem>>, vector<16x128xf32>
    tpu.vector_store %arg10[%c0_17, %c0_18], %37 {strides = array<i32>} : memref<16x128xf32, #tpu.memory_space<vmem>>, vector<16x128xf32>,
    %cst_19 = arith.constant dense<0.000000e+00> : vector<16x32xf32>
    %39 = tpu.matmul %30, %9, %cst_19 {dimension_numbers = #tpu.dot_dimension_numbers<[1], [0], [0], [1], [0, 0, 1, 1], [], []>} : vector<16x128xbf16>, vector<128x32xbf16>, vector<16x32xf32> -> vector<16x32xf32>
    %c0_20 = arith.constant 0 : index
    %c0_21 = arith.constant 0 : index
    %40 = vector.load %arg11[%c0_20, %c0_21] : memref<16x32xf32, #tpu.memory_space<vmem>>, vector<16x32xf32>
    %41 = vector.extract_strided_slice %25 {offsets = [0, 0], sizes = [16, 1], strides = [1, 1]} : vector<16x128xf32> to vector<16x1xf32>
    %42 = vector.broadcast %41 : vector<16x1xf32> to vector<16x32xf32>
    %43 = arith.mulf %40, %42 : vector<16x32xf32>
    %44 = arith.addf %43, %39 : vector<16x32xf32>
    %c0_22 = arith.constant 0 : index
    %c0_23 = arith.constant 0 : index
    %45 = vector.load %arg11[%c0_22, %c0_23] : memref<16x32xf32, #tpu.memory_space<vmem>>, vector<16x32xf32>
    tpu.vector_store %arg11[%c0_22, %c0_23], %44 {strides = array<i32>} : memref<16x32xf32, #tpu.memory_space<vmem>>, vector<16x32xf32>,
    %c0_24 = arith.constant 0 : index
    %c0_25 = arith.constant 0 : index
    %46 = vector.load %arg9[%c0_24, %c0_25] : memref<16x128xf32, #tpu.memory_space<vmem>>, vector<16x128xf32>
    tpu.vector_store %arg9[%c0_24, %c0_25], %23 {strides = array<i32>} : memref<16x128xf32, #tpu.memory_space<vmem>>, vector<16x128xf32>,
    %c0_i32_26 = arith.constant 0 : i32
    %47 = arith.cmpi eq, %arg3, %c0_i32_26 : i32
    %48 = arith.extui %47 : i1 to i32
    %c0_i32_27 = arith.constant 0 : i32
    %49 = arith.cmpi ne, %48, %c0_i32_27 : i32
    scf.if %49 {
      %c0_28 = arith.constant 0 : index
      %c0_29 = arith.constant 0 : index
      %50 = vector.load %arg10[%c0_28, %c0_29] : memref<16x128xf32, #tpu.memory_space<vmem>>, vector<16x128xf32>
      %51 = tpu.reciprocal %50 {approx = true} : vector<16x128xf32> -> vector<16x128xf32>
      %c0_30 = arith.constant 0 : index
      %c0_31 = arith.constant 0 : index
      %52 = vector.load %arg11[%c0_30, %c0_31] : memref<16x32xf32, #tpu.memory_space<vmem>>, vector<16x32xf32>
      %53 = vector.extract_strided_slice %51 {offsets = [0, 0], sizes = [16, 1], strides = [1, 1]} : vector<16x128xf32> to vector<16x1xf32>
      %54 = vector.broadcast %53 : vector<16x1xf32> to vector<16x32xf32>
      %55 = arith.mulf %52, %54 : vector<16x32xf32>
      %c0_32 = arith.constant 0 : index
      %c0_33 = arith.constant 0 : index
      %c0_34 = arith.constant 0 : index
      %c0_35 = arith.constant 0 : index
      %56 = vector.load %arg7[%c0_32, %c0_33, %c0_34, %c0_35] : memref<1x1x16x32xf32, #tpu.memory_space<vmem>>, vector<1x1x16x32xf32>
      %57 = vector.shape_cast %56 : vector<1x1x16x32xf32> to vector<16x32xf32>
      %58 = vector.shape_cast %55 : vector<16x32xf32> to vector<1x1x16x32xf32>
      tpu.vector_store %arg7[%c0_32, %c0_33, %c0_34, %c0_35], %58 {strides = array<i32>} : memref<1x1x16x32xf32, #tpu.memory_space<vmem>>, vector<1x1x16x32xf32>,
    } else {
    }
    return
  }
  func.func @transform_0(%arg0: i32, %arg1: i32, %arg2: i32, %arg3: i32) -> (i32, i32, i32, i32) {
    %c0_i32 = arith.constant 0 : i32
    %c0_i32_0 = arith.constant 0 : i32
    return %arg0, %arg1, %arg2, %c0_i32 : i32, i32, i32, i32
  }
  func.func @transform_1(%arg0: i32, %arg1: i32, %arg2: i32, %arg3: i32) -> (i32, i32, i32, i32) {
    %c0_i32 = arith.constant 0 : i32
    %c0_i32_0 = arith.constant 0 : i32
    return %arg0, %arg1, %arg3, %c0_i32 : i32, i32, i32, i32
  }
  func.func @transform_2(%arg0: i32, %arg1: i32, %arg2: i32, %arg3: i32) -> (i32, i32, i32, i32) {
    %c0_i32 = arith.constant 0 : i32
    %c0_i32_0 = arith.constant 0 : i32
    return %arg0, %arg1, %arg3, %c0_i32 : i32, i32, i32, i32
  }
  func.func @transform_3(%arg0: i32, %arg1: i32, %arg2: i32, %arg3: i32) -> (i32, i32, i32, i32) {
    %c0_i32 = arith.constant 0 : i32
    %c0_i32_0 = arith.constant 0 : i32
    return %arg0, %arg1, %arg2, %c0_i32 : i32, i32, i32, i32
  }
}

</mosaic_0001>

<llo_original>
// kernel: tpu_custom_call.1
$region0: #{tpu_custom_call.1}
  #allocation0 [shape = 'u32[]', space=smem, size = 0x4, offset = 0x4, fixed_abs, tag = 'smem constant byte address 0x4 - core index']
  #allocation1 [shape = 'u32[144,128]{1,0:T(1,128)}', space=vmem, size = 0x12000, scoped, tag = 'internal scratch']
  #allocation2 [shape = 'bf16[16,32]{1,0:T(16,128)(2,1)}', space=vmem, size = 0x1000, scoped, tag = 'scratch operand']
  #allocation3 [shape = 'f32[16,128]{1,0:T(8,128)}', space=vmem, size = 0x2000, scoped, tag = 'scratch operand']
  #allocation4 [shape = 'f32[16,128]{1,0:T(8,128)}', space=vmem, size = 0x2000, scoped, tag = 'scratch operand']
  #allocation5 [shape = 'f32[16,32]{1,0:T(8,128)}', space=vmem, size = 0x2000, scoped, tag = 'scratch operand']
  %s0 = inlined_call_operand.vmem [shape: f32[2,2,16,32], index: 0, kind: input, shape index: {}]
  %s1 = inlined_call_operand.vmem [shape: f32[2,2,128,32], index: 1, kind: input, shape index: {}]
  %s2 = inlined_call_operand.vmem [shape: f32[2,2,128,32], index: 2, kind: input, shape index: {}]
  %s3 = inlined_call_operand.hbm [shape: f32[2,2,16,32], index: 3, kind: output, shape index: {}]
  %s4 = sld [smem:[#allocation0]]
  $region53: #{tpu_custom_call.1} parent=0
    _
  %s6 = ssub.s32 1, %s4
  %s7 = scalar_select 0, %s6, %s4
  $region1: #{tpu_custom_call.1} parent=0
    #allocation6 [shape = 'u8[16384]{0}', space=vmem, size = 0x4000, scoped, tag = 'output window, operand 0']
    #allocation7 [shape = 's32[2]{0}', space=sflag, size = 0x8, scoped, tag = 'scoped memory for tpu_custom_call.1']
    %8 = vsyncpa [#allocation7], 0
    %s9 = scalar_lea.sflag [#allocation7], 1
    %10 = vsyncpa %s9, 0
    loop: start=0, step=1, limit=6
    $region2: #{tpu_custom_call.1} parent=1 // loop_pre_header
      _
    $region3: #{tpu_custom_call.1} parent=1 // loop_header
      %s12 = sphi 0, %s16
      %p13 = scmp.ge.s32.totalorder %s12, 6
      %s19 = sphi 0, %s45
      %s20 = sphi 0, %s41
      %s21 = sphi 0, %s37
      %s22 = sphi 0, %s33
      %s23 = sphi 0, %s19
      %s24 = sphi 0, %s20
      %s25 = sphi 0, %s21
      %s26 = sphi 0, %s22
      %s27 = sphi 0, %s23
      %s28 = sphi 0, %s24
      %s29 = sphi 0, %s25
      %s30 = sphi 0, %s26
      %s52 = sphi 0, %s54
      %s55 = sphi 0, %s52
      %s56 = sphi 0, %s55
      %s72 = sphi 0, %s56
      %s82 = sphi 0, %s84
      %s85 = sphi 0, %s82
      %s86 = sphi 0, %s85
      %s102 = sphi 0, %s86
      %s112 = sphi 0, %s114
      %s115 = sphi 0, %s112
      %s116 = sphi 0, %s115
      %s132 = sphi 0, %s116
      %s142 = sphi 0, %s144
      %s145 = sphi 0, %s142
      %s146 = sphi 0, %s145
      %s162 = sphi 0, %s146
    $region4: #{tpu_custom_call.1} parent=1 // loop_header_branch
      %15 = sbr.rel (%p13) target = $region8
    $region5: #{tpu_custom_call.1} parent=1 // loop_body
      %s17 = ssub.s32 %s12, 1
      %s18 = ssub.s32 %s12, 2
      %s31 = sadd.s32 1, %s22
      %p32 = scmp.ge.s32.totalorder %s31, 1
      %s33 = scalar_select %p32, 0, %s31
      %s34 = sadd.s32 1, %s21
      %s35 = scalar_select %p32, %s34, %s21
      %p36 = scmp.ge.s32.totalorder %s35, 1
      %s37 = scalar_select %p36, 0, %s35
      %s38 = sadd.s32 1, %s20
      %s39 = scalar_select %p36, %s38, %s20
      %p40 = scmp.ge.s32.totalorder %s39, 2
      %s41 = scalar_select %p40, 0, %s39
      %s42 = sadd.s32 1, %s19
      %s43 = scalar_select %p40, %s42, %s19
      %p44 = scmp.ge.s32.totalorder %s43, 2
      %s45 = scalar_select %p44, 0, %s43
      %s46 = ssub.s32 %s19, %s45
      %s47 = ssub.s32 %s20, %s41
      %s48 = sor.u32 %s46, %s47
      %s49 = ssub.s32 %s21, %s37
      %s50 = sor.u32 %s48, %s49
      %p51 = scmp.eq.s32.totalorder %s50, 0
      %s53 = sadd.s32 %s52, 1
      %s54 = scalar_select %p51, %s52, %s53
      %p57 = pneg %p51
      %p58 = scmp.eq.s32.totalorder %s12, 3
      %p59 = por %p57, %p58
      %p60 = scmp.ne.s32.totalorder %s52, %s55
      %p61 = scmp.eq.s32.totalorder %s12, 0
      %p62 = por %p60, %p61
      %p63 = scmp.ne.s32.totalorder %s52, %s55
      %p64 = scmp.eq.s32.totalorder %s17, 3
      %p65 = por %p63, %p64
      %p66 = scmp.ne.s32.totalorder %s55, %s56
      %p67 = scmp.eq.s32.totalorder %s17, 0
      %p68 = por %p66, %p67
      %p69 = scmp.ne.s32.totalorder %s55, %s56
      %p70 = scmp.eq.s32.totalorder %s18, 3
      %p71 = por %p69, %p70
      %p73 = scmp.ne.s32.totalorder %s56, %s72
      %p74 = scmp.eq.s32.totalorder %s18, 0
      %p75 = por %p73, %p74
      %s76 = ssub.s32 %s19, %s45
      %s77 = ssub.s32 %s20, %s41
      %s78 = sor.u32 %s76, %s77
      %s79 = ssub.s32 %s22, %s33
      %s80 = sor.u32 %s78, %s79
      %p81 = scmp.eq.s32.totalorder %s80, 0
      %s83 = sadd.s32 %s82, 1
      %s84 = scalar_select %p81, %s82, %s83
      %p87 = pneg %p81
      %p88 = scmp.eq.s32.totalorder %s12, 3
      %p89 = por %p87, %p88
      %p90 = scmp.ne.s32.totalorder %s82, %s85
      %p91 = scmp.eq.s32.totalorder %s12, 0
      %p92 = por %p90, %p91
      %p93 = scmp.ne.s32.totalorder %s82, %s85
      %p94 = scmp.eq.s32.totalorder %s17, 3
      %p95 = por %p93, %p94
      %p96 = scmp.ne.s32.totalorder %s85, %s86
      %p97 = scmp.eq.s32.totalorder %s17, 0
      %p98 = por %p96, %p97
      %p99 = scmp.ne.s32.totalorder %s85, %s86
      %p100 = scmp.eq.s32.totalorder %s18, 3
      %p101 = por %p99, %p100
      %p103 = scmp.ne.s32.totalorder %s86, %s102
      %p104 = scmp.eq.s32.totalorder %s18, 0
      %p105 = por %p103, %p104
      %s106 = ssub.s32 %s19, %s45
      %s107 = ssub.s32 %s20, %s41
      %s108 = sor.u32 %s106, %s107
      %s109 = ssub.s32 %s22, %s33
      %s110 = sor.u32 %s108, %s109
      %p111 = scmp.eq.s32.totalorder %s110, 0
      %s113 = sadd.s32 %s112, 1
      %s114 = scalar_select %p111, %s112, %s113
      %p117 = pneg %p111
      %p118 = scmp.eq.s32.totalorder %s12, 3
      %p119 = por %p117, %p118
      %p120 = scmp.ne.s32.totalorder %s112, %s115
      %p121 = scmp.eq.s32.totalorder %s12, 0
      %p122 = por %p120, %p121
      %p123 = scmp.ne.s32.totalorder %s112, %s115
      %p124 = scmp.eq.s32.totalorder %s17, 3
      %p125 = por %p123, %p124
      %p126 = scmp.ne.s32.totalorder %s115, %s116
      %p127 = scmp.eq.s32.totalorder %s17, 0
      %p128 = por %p126, %p127
      %p129 = scmp.ne.s32.totalorder %s115, %s116
      %p130 = scmp.eq.s32.totalorder %s18, 3
      %p131 = por %p129, %p130
      %p133 = scmp.ne.s32.totalorder %s116, %s132
      %p134 = scmp.eq.s32.totalorder %s18, 0
      %p135 = por %p133, %p134
      %s136 = ssub.s32 %s19, %s45
      %s137 = ssub.s32 %s20, %s41
      %s138 = sor.u32 %s136, %s137
      %s139 = ssub.s32 %s21, %s37
      %s140 = sor.u32 %s138, %s139
      %p141 = scmp.eq.s32.totalorder %s140, 0
      %s143 = sadd.s32 %s142, 1
      %s144 = scalar_select %p141, %s142, %s143
      %p147 = pneg %p141
      %p148 = scmp.eq.s32.totalorder %s12, 3
      %p149 = por %p147, %p148
      %p150 = scmp.ne.s32.totalorder %s142, %s145
      %p151 = scmp.eq.s32.totalorder %s12, 0
      %p152 = por %p150, %p151
      %p153 = scmp.ne.s32.totalorder %s142, %s145
      %p154 = scmp.eq.s32.totalorder %s17, 3
      %p155 = por %p153, %p154
      %p156 = scmp.ne.s32.totalorder %s145, %s146
      %p157 = scmp.eq.s32.totalorder %s17, 0
      %p158 = por %p156, %p157
      %p159 = scmp.ne.s32.totalorder %s145, %s146
      %p160 = scmp.eq.s32.totalorder %s18, 3
      %p161 = por %p159, %p160
      %p163 = scmp.ne.s32.totalorder %s146, %s162
      %p164 = scmp.eq.s32.totalorder %s18, 0
      %p165 = por %p163, %p164
      %p166 = scmp.le.s32.totalorder 1, %s12
      %p167 = scmp.lt.s32.totalorder %s12, 5
      %p168 = pnand %p166, %p167
      %p169 = pneg %p168
      // Predicated region
      $region9: #{tpu_custom_call.1} parent=5 // pred_check
        _
      $region10: #{tpu_custom_call.1} parent=5 // pred_check_branch
        %171 = sbr.rel (%p168) target = $region12
      $region11: #{tpu_custom_call.1} parent=5 // pred_region
        %s172 = ssub.s32 %s12, 1
      $region12: #{tpu_custom_call.1} parent=5 // pred_fallthru
        _
      %p173 = scmp.lt.s32.totalorder %s12, 4
      // Predicated region
      $region13: #{tpu_custom_call.1} parent=5 // pred_check
        %p174 = pneg %p173
      $region14: #{tpu_custom_call.1} parent=5 // pred_check_branch
        %176 = sbr.rel (%p174) target = $region16
      $region15: #{tpu_custom_call.1} parent=5 // pred_region
        // Predicated region
        $region17: #{tpu_custom_call.1} parent=15 // pred_check
          %p177 = pneg %p62
        $region18: #{tpu_custom_call.1} parent=15 // pred_check_branch
          %179 = sbr.rel (%p177) target = $region20
        $region19: #{tpu_custom_call.1} parent=15 // pred_region
          %s180 = smul.u32 2, %s21
          %p181 = scmp.lt.s32.totalorder %s19, 1
          %s182 = scalar_select %p181, %s19, 1
          %p183 = scmp.lt.s32.totalorder %s20, 1
          %s184 = scalar_select %p183, %s20, 1
          %p185 = scmp.lt.s32.totalorder %s180, 1
          %s186 = scalar_select %p185, %s180, 1
          %s187 = smul.addr %s184, 2
          %s188 = sadd.s32 %s186, %s187
          %s189 = smul.addr %s182, 4
          %s190 = sadd.s32 %s188, %s189
          %s191 = smul.addr %s190, 8
          %s192 = scalar_lea.vmem %s0, %s191
          %s193 = smul.u32 2, %s21
        $region20: #{tpu_custom_call.1} parent=15 // pred_fallthru
          _
        // Predicated region
        $region21: #{tpu_custom_call.1} parent=15 // pred_check
          %p194 = pneg %p92
        $region22: #{tpu_custom_call.1} parent=15 // pred_check_branch
          %196 = sbr.rel (%p194) target = $region24
        $region23: #{tpu_custom_call.1} parent=15 // pred_region
          %s197 = smul.u32 16, %s22
          %p198 = scmp.lt.s32.totalorder %s19, 1
          %s199 = scalar_select %p198, %s19, 1
          %p200 = scmp.lt.s32.totalorder %s20, 1
          %s201 = scalar_select %p200, %s20, 1
          %p202 = scmp.lt.s32.totalorder %s197, 15
          %s203 = scalar_select %p202, %s197, 15
          %s204 = smul.addr %s201, 16
          %s205 = sadd.s32 %s203, %s204
          %s206 = smul.addr %s199, 32
          %s207 = sadd.s32 %s205, %s206
          %s208 = smul.addr %s207, 8
          %s209 = scalar_lea.vmem %s1, %s208
          %s210 = smul.u32 16, %s22
        $region24: #{tpu_custom_call.1} parent=15 // pred_fallthru
          _
        // Predicated region
        $region25: #{tpu_custom_call.1} parent=15 // pred_check
          %p211 = pneg %p122
        $region26: #{tpu_custom_call.1} parent=15 // pred_check_branch
          %213 = sbr.rel (%p211) target = $region28
        $region27: #{tpu_custom_call.1} parent=15 // pred_region
          %s214 = smul.u32 16, %s22
          %p215 = scmp.lt.s32.totalorder %s19, 1
          %s216 = scalar_select %p215, %s19, 1
          %p217 = scmp.lt.s32.totalorder %s20, 1
          %s218 = scalar_select %p217, %s20, 1
          %p219 = scmp.lt.s32.totalorder %s214, 15
          %s220 = scalar_select %p219, %s214, 15
          %s221 = smul.addr %s218, 16
          %s222 = sadd.s32 %s220, %s221
          %s223 = smul.addr %s216, 32
          %s224 = sadd.s32 %s222, %s223
          %s225 = smul.addr %s224, 8
          %s226 = scalar_lea.vmem %s2, %s225
          %s227 = smul.u32 16, %s22
        $region28: #{tpu_custom_call.1} parent=15 // pred_fallthru
          _
      $region16: #{tpu_custom_call.1} parent=5 // pred_fallthru
        _
      %p228 = scmp.le.s32.totalorder 1, %s12
      %p229 = scmp.lt.s32.totalorder %s12, 5
      %p230 = pnand %p228, %p229
      %p231 = pneg %p230
      // Predicated region
      $region29: #{tpu_custom_call.1} parent=5 // pred_check
        _
      $region30: #{tpu_custom_call.1} parent=5 // pred_check_branch
        %233 = sbr.rel (%p230) target = $region32
      $region31: #{tpu_custom_call.1} parent=5 // pred_region
        %s234 = ssub.s32 %s12, 1
        %s235 = smul.u32 2, %s25
        %p236 = scmp.lt.s32.totalorder %s23, 1
        %s237 = scalar_select %p236, %s23, 1
        %p238 = scmp.lt.s32.totalorder %s24, 1
        %s239 = scalar_select %p238, %s24, 1
        %p240 = scmp.lt.s32.totalorder %s235, 1
        %s241 = scalar_select %p240, %s235, 1
        %s242 = smul.addr %s239, 2
        %s243 = sadd.s32 %s241, %s242
        %s244 = smul.addr %s237, 4
        %s245 = sadd.s32 %s243, %s244
        %s246 = smul.addr %s245, 8
        %s247 = scalar_lea.vmem %s0, %s246
        %p248 = pneg %p68
        %p249 = pneg %p65
        %s250 = smul.u32 16, %s26
        %p251 = scmp.lt.s32.totalorder %s23, 1
        %s252 = scalar_select %p251, %s23, 1
        %p253 = scmp.lt.s32.totalorder %s24, 1
        %s254 = scalar_select %p253, %s24, 1
        %p255 = scmp.lt.s32.totalorder %s250, 15
        %s256 = scalar_select %p255, %s250, 15
        %s257 = smul.addr %s254, 16
        %s258 = sadd.s32 %s256, %s257
        %s259 = smul.addr %s252, 32
        %s260 = sadd.s32 %s258, %s259
        %s261 = smul.addr %s260, 8
        %s262 = scalar_lea.vmem %s1, %s261
        %p263 = pneg %p98
        %p264 = pneg %p95
        %s265 = smul.u32 16, %s26
        %p266 = scmp.lt.s32.totalorder %s23, 1
        %s267 = scalar_select %p266, %s23, 1
        %p268 = scmp.lt.s32.totalorder %s24, 1
        %s269 = scalar_select %p268, %s24, 1
        %p270 = scmp.lt.s32.totalorder %s265, 15
        %s271 = scalar_select %p270, %s265, 15
        %s272 = smul.addr %s269, 16
        %s273 = sadd.s32 %s271, %s272
        %s274 = smul.addr %s267, 32
        %s275 = sadd.s32 %s273, %s274
        %s276 = smul.addr %s275, 8
        %s277 = scalar_lea.vmem %s2, %s276
        %p278 = pneg %p128
        %p279 = pneg %p125
        %p280 = pneg %p158
        %p281 = pneg %p155
        %s282 = sand.u32 %s145, 1
        %s283 = scalar_lea.sflag [#allocation7], %s282
        %s284 = sand.u32 %s145, 1
        %s285 = smul.addr %s284, 16
        %s286 = scalar_lea.vmem [#allocation6], %s285
        %s287 = smul.u32 2, %s25
        %p288 = scmp.lt.s32.totalorder %s23, 1
        %s289 = scalar_select %p288, %s23, 1
        %p290 = scmp.lt.s32.totalorder %s24, 1
        %s291 = scalar_select %p290, %s24, 1
        %p292 = scmp.lt.s32.totalorder %s287, 1
        %s293 = scalar_select %p292, %s287, 1
        %s294 = smul.addr %s291, 2
        %s295 = sadd.s32 %s293, %s294
        %s296 = smul.addr %s289, 4
        %s297 = sadd.s32 %s295, %s296
        %s298 = smul.addr %s297, 8
        %s299 = scalar_lea.vmem %s0, %s298
        %s300 = smul.u32 2, %s25
        %s301 = smul.u32 16, %s26
        %p302 = scmp.lt.s32.totalorder %s23, 1
        %s303 = scalar_select %p302, %s23, 1
        %p304 = scmp.lt.s32.totalorder %s24, 1
        %s305 = scalar_select %p304, %s24, 1
        %p306 = scmp.lt.s32.totalorder %s301, 15
        %s307 = scalar_select %p306, %s301, 15
        %s308 = smul.addr %s305, 16
        %s309 = sadd.s32 %s307, %s308
        %s310 = smul.addr %s303, 32
        %s311 = sadd.s32 %s309, %s310
        %s312 = smul.addr %s311, 8
        %s313 = scalar_lea.vmem %s1, %s312
        %s314 = smul.u32 16, %s26
        %s315 = smul.u32 16, %s26
        %p316 = scmp.lt.s32.totalorder %s23, 1
        %s317 = scalar_select %p316, %s23, 1
        %p318 = scmp.lt.s32.totalorder %s24, 1
        %s319 = scalar_select %p318, %s24, 1
        %p320 = scmp.lt.s32.totalorder %s315, 15
        %s321 = scalar_select %p320, %s315, 15
        %s322 = smul.addr %s319, 16
        %s323 = sadd.s32 %s321, %s322
        %s324 = smul.addr %s317, 32
        %s325 = sadd.s32 %s323, %s324
        %s326 = smul.addr %s325, 8
        %s327 = scalar_lea.vmem %s2, %s326
        %s328 = smul.u32 16, %s26
        %s329 = smul.u32 2, %s25
        %p331 = scmp.eq.s32.totalorder %s26, 0
        // Predicated region
        $region33: #{tpu_custom_call.1} parent=31 // pred_check
          %p332 = pneg %p331
        $region34: #{tpu_custom_call.1} parent=31 // pred_check_branch
          %334 = sbr.rel (%p332) target = $region36
        $region35: #{tpu_custom_call.1} parent=31 // pred_region
          %v335 = vld [vmem:[%s299] sm:$0xff]
          %v336 = vld [vmem:[%s299 + $0x8] sm:$0xff]
          %v337 = vmul.f32 %v335, 0.17677669
          %v338 = vmul.f32 %v336, 0.17677669
          %v339 = vpack.c.bf16 %v338, %v337
          %vm340 = vcmask 261120
          %341 = vst.msk [vmem:[#allocation2] sm:$0xff] %vm340, %v339
          %342 = vst [vmem:[#allocation3] sm:$0xff] -1e+30
          %343 = vst [vmem:[#allocation3 + $0x8] sm:$0xff] -1e+30
          %344 = vst [vmem:[#allocation4] sm:$0xff] 0.0
          %345 = vst [vmem:[#allocation4 + $0x8] sm:$0xff] 0.0
          %346 = vst.msk [vmem:[#allocation5] sm:$0xff] %vm340, 0.0
          %347 = vst.msk [vmem:[#allocation5 + $0x8] sm:$0xff] %vm340, 0.0
        $region36: #{tpu_custom_call.1} parent=31 // pred_fallthru
          _
        %v348 = vld [vmem:[#allocation2] sm:$0xff]
        %v349 = vld [vmem:[%s313] sm:$0xff]
        %v350 = vld [vmem:[%s313 + $0x8] sm:$0xff]
        %v351 = vld [vmem:[%s313 + $0x10] sm:$0xff]
        %v352 = vld [vmem:[%s313 + $0x18] sm:$0xff]
        %v353 = vld [vmem:[%s313 + $0x20] sm:$0xff]
        %v354 = vld [vmem:[%s313 + $0x28] sm:$0xff]
        %v355 = vld [vmem:[%s313 + $0x30] sm:$0xff]
        %v356 = vld [vmem:[%s313 + $0x38] sm:$0xff]
        %v357 = vld [vmem:[%s313 + $0x40] sm:$0xff]
        %v358 = vld [vmem:[%s313 + $0x48] sm:$0xff]
        %v359 = vld [vmem:[%s313 + $0x50] sm:$0xff]
        %v360 = vld [vmem:[%s313 + $0x58] sm:$0xff]
        %v361 = vld [vmem:[%s313 + $0x60] sm:$0xff]
        %v362 = vld [vmem:[%s313 + $0x68] sm:$0xff]
        %v363 = vld [vmem:[%s313 + $0x70] sm:$0xff]
        %v364 = vld [vmem:[%s313 + $0x78] sm:$0xff]
        %v365 = vpack.c.bf16 %v350, %v349
        %v366 = vpack.c.bf16 %v352, %v351
        %v367 = vpack.c.bf16 %v354, %v353
        %v368 = vpack.c.bf16 %v356, %v355
        %v369 = vpack.c.bf16 %v358, %v357
        %v370 = vpack.c.bf16 %v360, %v359
        %v371 = vpack.c.bf16 %v362, %v361
        %v372 = vpack.c.bf16 %v364, %v363
        %v373 = vld [vmem:[%s327] sm:$0xff]
        %v374 = vld [vmem:[%s327 + $0x8] sm:$0xff]
        %v375 = vld [vmem:[%s327 + $0x10] sm:$0xff]
        %v376 = vld [vmem:[%s327 + $0x18] sm:$0xff]
        %v377 = vld [vmem:[%s327 + $0x20] sm:$0xff]
        %v378 = vld [vmem:[%s327 + $0x28] sm:$0xff]
        %v379 = vld [vmem:[%s327 + $0x30] sm:$0xff]
        %v380 = vld [vmem:[%s327 + $0x38] sm:$0xff]
        %v381 = vld [vmem:[%s327 + $0x40] sm:$0xff]
        %v382 = vld [vmem:[%s327 + $0x48] sm:$0xff]
        %v383 = vld [vmem:[%s327 + $0x50] sm:$0xff]
        %v384 = vld [vmem:[%s327 + $0x58] sm:$0xff]
        %v385 = vld [vmem:[%s327 + $0x60] sm:$0xff]
        %v386 = vld [vmem:[%s327 + $0x68] sm:$0xff]
        %v387 = vld [vmem:[%s327 + $0x70] sm:$0xff]
        %v388 = vld [vmem:[%s327 + $0x78] sm:$0xff]
        %v389 = vpack.c.bf16 %v374, %v373
        %v390 = vpack.c.bf16 %v376, %v375
        %v391 = vpack.c.bf16 %v378, %v377
        %v392 = vpack.c.bf16 %v380, %v379
        %v393 = vpack.c.bf16 %v382, %v381
        %v394 = vpack.c.bf16 %v384, %v383
        %v395 = vpack.c.bf16 %v386, %v385
        %v396 = vpack.c.bf16 %v388, %v387
        %vm397 = vcmask 261120
        %v399 = vsel %vm397, %v348, 0
        %v402 = vsel %vm397, %v365, 0
        %v405 = vsel %vm397, %v366, 0
        %v408 = vsel %vm397, %v367, 0
        %v411 = vsel %vm397, %v368, 0
        %v414 = vsel %vm397, %v369, 0
        %v417 = vsel %vm397, %v370, 0
        %v420 = vsel %vm397, %v371, 0
        %v423 = vsel %vm397, %v372, 0
        %425 = vmatprep.subr.bf16.mxu0 0
        %426 = vmatpush1.bf16.xpose.msra.mxu0 %v402
        %427 = vmatprep.subr.bf16.mxu0 0
        %428 = vmatpush1.bf16.xpose.msra.mxu0 %v405
        %429 = vmatprep.subr.bf16.mxu0 0
        %430 = vmatpush1.bf16.xpose.msra.mxu0 %v408
        %431 = vmatprep.subr.bf16.mxu0 0
        %432 = vmatpush1.bf16.xpose.msra.mxu0 %v411
        %433 = vmatprep.subr.bf16.mxu0 0
        %434 = vmatpush1.bf16.xpose.msra.mxu0 %v414
        %435 = vmatprep.subr.bf16.mxu0 0
        %436 = vmatpush1.bf16.xpose.msra.mxu0 %v417
        %437 = vmatprep.subr.bf16.mxu0 0
        %438 = vmatpush1.bf16.xpose.msra.mxu0 %v420
        %439 = vmatprep.subr.bf16.mxu0 0
        %440 = vmatpush1.bf16.xpose.msra.mxu0 %v423
        %441 = vmatprep.subr.bf16.mxu0 0
        %442 = vmatpush1.bf16.xpose.msra.mxu0 0
        %443 = vmatprep.subr.bf16.mxu0 0
        %444 = vmatpush1.bf16.xpose.msra.mxu0 0
        %445 = vmatprep.subr.bf16.mxu0 0
        %446 = vmatpush1.bf16.xpose.msra.mxu0 0
        %447 = vmatprep.subr.bf16.mxu0 0
        %448 = vmatpush1.bf16.xpose.msra.mxu0 0
        %449 = vmatprep.subr.bf16.mxu0 0
        %450 = vmatpush1.bf16.xpose.msra.mxu0 0
        %451 = vmatprep.subr.bf16.mxu0 0
        %452 = vmatpush1.bf16.xpose.msra.mxu0 0
        %453 = vmatprep.subr.bf16.mxu0 0
        %454 = vmatpush1.bf16.xpose.msra.mxu0 0
        %455 = vmatprep.subr.bf16.mxu0 0
        %456 = vmatpush1.bf16.xpose.msra.mxu0 0
        %457 = vmatprep.mubr.bf16.mxu0 0
        %458 = vmatmul.mubr.bf16.gmra.mrb[0].mxu0 %v399
        %v459 = vpop.f32.mrb[0].mxu0
        %v460 = vadd.f32 0.0, %v459
        %v461 = vpop.f32.mrb[0].mxu0
        %v462 = vpop.f32.mrb[0].mxu0
        %v463 = vadd.f32 0.0, %v462
        %v464 = vpop.f32.mrb[0].mxu0
        %465 = vdwg.mxu0
        %s466 = smul.u32 %s26, 128
        %v467 = vlaneseq
        %v468 = vand.u32 %v467, 127
        %v469 = vstv %s466
        %v470 = vadd.s32 %v469, %v468
        %vm471 = vcmp.lt.s32.totalorder %v470, 8
        %v472 = vsel %vm471, %v460, -1e+30
        %v473 = vsel %vm471, %v463, -1e+30
        %v474 = vld [vmem:[#allocation3] sm:$0xff]
        %v475 = vld [vmem:[#allocation3 + $0x8] sm:$0xff]
        %476 = vmax.xlane.f32.xlu0 %v472
        %v477 = vpop.xlane.xlu0 %476
        %478 = vmax.xlane.f32.xlu0 %v473
        %v479 = vpop.xlane.xlu0 %478
        %v480 = vmax.f32 %v474, %v477
        %v481 = vmax.f32 %v475, %v479
        %v482 = vsub.f32 %v474, %v480
        %v483 = vsub.f32 %v475, %v481
        %v484 = vmul.f32 %v482, 1.442695
        %v485 = vpow.pop %v484
        %v486 = vmul.f32 %v483, 1.442695
        %v487 = vpow.pop %v486
        %489 = vset.pattern.permute.xlu0 0
        %490 = vperm.xlu0 %489, %v480
        %v491 = vpop.permute.xlu0 %490
        %494 = vset.pattern.permute.xlu0 0
        %495 = vperm.xlu0 %494, %v481
        %v496 = vpop.permute.xlu0 %495
        %v498 = vsub.f32 %v472, %v491
        %v499 = vsub.f32 %v473, %v496
        %v500 = vpack.c.bf16 %v499, %v498
        %v502 = vmul.bf16 %v500, 1069105081
        %v503 = vpow.bf16.pop %v502
        %v504 = vld [vmem:[#allocation4] sm:$0xff]
        %v505 = vld [vmem:[#allocation4 + $0x8] sm:$0xff]
        %v506 = vmul.f32 %v485, %v504
        %v507 = vmul.f32 %v487, %v505
        %v508 = vunpack.c.l.bf16 %v503
        %v509 = vunpack.c.h.bf16 %v503
        %510 = vadd.xlane.f32.xlu0 %v508
        %v511 = vpop.xlane.xlu0 %510
        %512 = vadd.xlane.f32.xlu0 %v509
        %v513 = vpop.xlane.xlu0 %512
        %v514 = vadd.f32 %v506, %v511
        %v515 = vadd.f32 %v507, %v513
        %516 = vst [vmem:[#allocation4] sm:$0xff] %v514
        %517 = vst [vmem:[#allocation4 + $0x8] sm:$0xff] %v515
        %518 = vmatprep.subr.bf16.mxu0 0
        %519 = vmatpush1.bf16.msra.mxu0 %v389
        %520 = vmatprep.subr.bf16.mxu0 0
        %521 = vmatpush1.bf16.msra.mxu0 %v390
        %522 = vmatprep.subr.bf16.mxu0 0
        %523 = vmatpush1.bf16.msra.mxu0 %v391
        %524 = vmatprep.subr.bf16.mxu0 0
        %525 = vmatpush1.bf16.msra.mxu0 %v392
        %526 = vmatprep.subr.bf16.mxu0 0
        %527 = vmatpush1.bf16.msra.mxu0 %v393
        %528 = vmatprep.subr.bf16.mxu0 0
        %529 = vmatpush1.bf16.msra.mxu0 %v394
        %530 = vmatprep.subr.bf16.mxu0 0
        %531 = vmatpush1.bf16.msra.mxu0 %v395
        %532 = vmatprep.subr.bf16.mxu0 0
        %533 = vmatpush1.bf16.msra.mxu0 %v396
        %534 = vmatprep.subr.bf16.mxu0 0
        %535 = vmatpush1.bf16.msra.mxu0 0
        %536 = vmatprep.subr.bf16.mxu0 0
        %537 = vmatpush1.bf16.msra.mxu0 0
        %538 = vmatprep.subr.bf16.mxu0 0
        %539 = vmatpush1.bf16.msra.mxu0 0
        %540 = vmatprep.subr.bf16.mxu0 0
        %541 = vmatpush1.bf16.msra.mxu0 0
        %542 = vmatprep.subr.bf16.mxu0 0
        %543 = vmatpush1.bf16.msra.mxu0 0
        %544 = vmatprep.subr.bf16.mxu0 0
        %545 = vmatpush1.bf16.msra.mxu0 0
        %546 = vmatprep.subr.bf16.mxu0 0
        %547 = vmatpush1.bf16.msra.mxu0 0
        %548 = vmatprep.subr.bf16.mxu0 0
        %549 = vmatpush1.bf16.msra.mxu0 0
        %550 = vmatprep.mubr.bf16.mxu0 0
        %551 = vmatmul.mubr.bf16.gmra.mrb[0].mxu0 %v503
        %v552 = vpop.f32.mrb[0].mxu0
        %v553 = vadd.f32 0.0, %v552
        %v554 = vpop.f32.mrb[0].mxu0
        %v555 = vpop.f32.mrb[0].mxu0
        %v556 = vadd.f32 0.0, %v555
        %v557 = vpop.f32.mrb[0].mxu0
        %558 = vdwg.mxu0
        %v559 = vld [vmem:[#allocation5] sm:$0xff]
        %v560 = vld [vmem:[#allocation5 + $0x8] sm:$0xff]
        %562 = vset.pattern.permute.xlu0 0
        %563 = vperm.xlu0 %562, %v485
        %v564 = vpop.permute.xlu0 %563
        %567 = vset.pattern.permute.xlu0 0
        %568 = vperm.xlu0 %567, %v487
        %v569 = vpop.permute.xlu0 %568
        %v571 = vmul.f32 %v559, %v564
        %v572 = vmul.f32 %v560, %v569
        %v573 = vadd.f32 %v571, %v553
        %v574 = vadd.f32 %v572, %v556
        %575 = vst.msk [vmem:[#allocation5] sm:$0xff] %vm397, %v573
        %576 = vst.msk [vmem:[#allocation5 + $0x8] sm:$0xff] %vm397, %v574
        %577 = vst [vmem:[#allocation3] sm:$0xff] %v480
        %578 = vst [vmem:[#allocation3 + $0x8] sm:$0xff] %v481
        // Predicated region
        $region37: #{tpu_custom_call.1} parent=31 // pred_check
          %p579 = pneg %p331
        $region38: #{tpu_custom_call.1} parent=31 // pred_check_branch
          %581 = sbr.rel (%p579) target = $region40
        $region39: #{tpu_custom_call.1} parent=31 // pred_region
          %v582 = vld [vmem:[#allocation4] sm:$0xff]
          %v583 = vld [vmem:[#allocation4 + $0x8] sm:$0xff]
          %v584 = vrcp.pop %v582
          %v585 = vrcp.pop %v583
          %v586 = vld [vmem:[#allocation5] sm:$0xff]
          %v587 = vld [vmem:[#allocation5 + $0x8] sm:$0xff]
          %589 = vset.pattern.permute.xlu0 0
          %590 = vperm.xlu0 %589, %v584
          %v591 = vpop.permute.xlu0 %590
          %594 = vset.pattern.permute.xlu0 0
          %595 = vperm.xlu0 %594, %v585
          %v596 = vpop.permute.xlu0 %595
          %v598 = vmul.f32 %v586, %v591
          %v599 = vmul.f32 %v587, %v596
          %600 = vst.msk [vmem:[%s286] sm:$0xff] %vm397, %v598
          %601 = vst.msk [vmem:[%s286 + $0x8] sm:$0xff] %vm397, %v599
        $region40: #{tpu_custom_call.1} parent=31 // pred_fallthru
          _
        %s602 = sand.u32 %s145, 1
        %s603 = scalar_lea.sflag [#allocation7], %s602
        %s604 = sand.u32 %s145, 1
        %s605 = smul.addr %s604, 16
        %s606 = scalar_lea.vmem [#allocation6], %s605
        // Predicated region
        $region41: #{tpu_custom_call.1} parent=31 // pred_check
          %p607 = pneg %p155
        $region42: #{tpu_custom_call.1} parent=31 // pred_check_branch
          %609 = sbr.rel (%p607) target = $region44
        $region43: #{tpu_custom_call.1} parent=31 // pred_region
          %s610 = smul.u32 2, %s25
          %s612 = ssub.s32 256, 256
          %613 = vsyncadd %s603, %s612
          %s614 = smul.addr %s24, 2
          %s615 = sadd.s32 %s610, %s614
          %s616 = smul.addr %s23, 4
          %s617 = sadd.s32 %s615, %s616
          %s618 = smul.addr %s617, 128
          %s619 = scalar_lea.hbm %s3, %s618
          %s620 = sshll.u32 %s606, 4
          %s621 = int_to_ptr.vmem [resolvable:$true] %s620
          %626 = dma.vmem_to_hbm [thread:$0]  %s621, 256, %s619, %s603, 128, 128, 8
        $region44: #{tpu_custom_call.1} parent=31 // pred_fallthru
          _
      $region32: #{tpu_custom_call.1} parent=5 // pred_fallthru
        _
      %p627 = scmp.le.s32.totalorder 2, %s12
      // Predicated region
      $region45: #{tpu_custom_call.1} parent=5 // pred_check
        %p628 = pneg %p627
      $region46: #{tpu_custom_call.1} parent=5 // pred_check_branch
        %630 = sbr.rel (%p628) target = $region48
      $region47: #{tpu_custom_call.1} parent=5 // pred_region
        %s631 = ssub.s32 %s12, 2
        // Predicated region
        $region49: #{tpu_custom_call.1} parent=47 // pred_check
          %p632 = pneg %p161
        $region50: #{tpu_custom_call.1} parent=47 // pred_check_branch
          %634 = sbr.rel (%p632) target = $region52
        $region51: #{tpu_custom_call.1} parent=47 // pred_region
          %s635 = sand.u32 %s146, 1
          %s636 = scalar_lea.sflag [#allocation7], %s635
          %s637 = sand.u32 %s146, 1
          %s638 = smul.addr %s637, 16
          %s639 = scalar_lea.vmem [#allocation6], %s638
          %640 = dma.done %s636, 256
        $region52: #{tpu_custom_call.1} parent=47 // pred_fallthru
          _
      $region48: #{tpu_custom_call.1} parent=5 // pred_fallthru
        _
    $region6: #{tpu_custom_call.1} parent=1 // loop_footer
      %s16 = sadd.s32 1, %s12
    $region7: #{tpu_custom_call.1} parent=1 // loop_footer_branch
      %11 = sbr.rel target = $region3
    $region8: #{tpu_custom_call.1} parent=1 // loop_exit
      _
    %641 = vsyncpa [#allocation7], 1
    %s642 = scalar_lea.sflag [#allocation7], 1
    %643 = vsyncpa %s642, 1

</llo_original>
